<compile_context>
chip_gen: v5e
topology: v5e:2x2
jax: 0.10.0
libtpu: 0.0.40
codegen_flags: <defaults>
</compile_context>

<pallas_src>
import jax
import jax.numpy as jnp
from jax.experimental import pallas as pl
from jax.experimental.pallas import tpu as pltpu


# ---------------------------------------------------------------------------
# Kernel: fused encoder->decoder chain for one batch tile (3 matmuls)
# ---------------------------------------------------------------------------
def _autoencoder_kernel(x_ref,
                        w1_ref, b1_ref,
                        w23_ref, b23_ref,
                        w4_ref, b4_ref,
                        out_ref):
    """Weights arrive pre-transposed ([in, out]), zero-padded to lane multiples
    and pre-cast to bf16; biases are f32 [1, out]. All dots accumulate in f32.
    W23/b23 are the exact composition of encoder layer 2 and decoder layer 1
    (no nonlinearity between them in the reference module)."""
    x = x_ref[...].astype(jnp.bfloat16)

    # Linear -> ReLU                                  (encoder layer 1)
    h1 = jnp.dot(x, w1_ref[...], preferred_element_type=jnp.float32) + b1_ref[...]
    h1 = jnp.maximum(h1, 0.0).astype(jnp.bfloat16)

    # (Linear ; Linear) fused -> ReLU                 (encoder 2 + decoder 1)
    h2 = jnp.dot(h1, w23_ref[...], preferred_element_type=jnp.float32) + b23_ref[...]
    h2 = jnp.maximum(h2, 0.0).astype(jnp.bfloat16)

    # Linear                                          (decoder layer 2)
    out = jnp.dot(h2, w4_ref[...], preferred_element_type=jnp.float32) + b4_ref[...]
    out_ref[...] = out.astype(out_ref.dtype)


# ---------------------------------------------------------------------------
# One-time parameter preparation (hoisted out of the per-call hot path)
# ---------------------------------------------------------------------------
def _round_up(x, m):
    return ((x + m - 1) // m) * m


def prepare_params(params, *, lane_multiple=128, compute_dtype=jnp.bfloat16):
    """Transpose to [in, out], zero-pad hidden/output dims to lane multiples,
    fuse the nonlinearity-free middle pair (W2.W3) in f32, cast to bf16.
    Call ONCE, not per forward."""
    H, D_in = params["w1"].shape          # w1: [hidden, in]
    D_out = params["w2"].shape[0]         # w2: [out, hidden]
    Hp = _round_up(H, lane_multiple)
    Dp = _round_up(D_out, lane_multiple)

    def pad_to(a, shape):
        return jnp.pad(a, [(0, s - d) for d, s in zip(a.shape, shape)])

    # f32 master copies, transposed to [in, out] and zero-padded.
    w1t = pad_to(params["w1"].T.astype(jnp.float32), (D_in, Hp))
    w2t = pad_to(params["w2"].T.astype(jnp.float32), (Hp, Dp))
    w3t = pad_to(params["w3"].T.astype(jnp.float32), (Dp, Hp))
    w4t = pad_to(params["w4"].T.astype(jnp.float32), (Hp, D_in))
    b1 = pad_to(params["b1"].astype(jnp.float32), (Hp,)).reshape(1, Hp)
    b2 = pad_to(params["b2"].astype(jnp.float32), (Dp,)).reshape(1, Dp)
    b3 = pad_to(params["b3"].astype(jnp.float32), (Hp,)).reshape(1, Hp)
    b4 = params["b4"].astype(jnp.float32).reshape(1, D_in)

    # Exact algebraic fusion (no nonlinearity between encoder out / decoder in):
    #   z @ w3t + b3 == h1 @ (w2t @ w3t) + (b2 @ w3t + b3)
    w23 = w2t @ w3t                       # [Hp, Hp], f32
    b23 = b2 @ w3t + b3                   # [1, Hp],  f32

    return dict(
        w1t=w1t.astype(compute_dtype), b1=b1,
        w23=w23.astype(compute_dtype), b23=b23,
        w4t=w4t.astype(compute_dtype), b4=b4,
    )


# ---------------------------------------------------------------------------
# VMEM-budget-aware tiling
# ---------------------------------------------------------------------------
def _vmem_budget_bytes():
    """Generation-aware scoped-VMEM budget: ~48 MiB on v7x (64 MiB physical),
    ~96 MiB on v5e/v6e (128 MiB physical), capped at 100 MiB."""
    cap = 64 * 1024 * 1024  # conservative default (v7x per-TensorCore)
    try:
        info = pltpu.get_tpu_info()
        cap = int(getattr(info, "vmem_capacity_bytes", cap))
    except Exception:
        pass  # info query only; fall back to the conservative default
    return min(int(cap * 3 // 4), 100 * 1024 * 1024)


def _pick_batch_tile(B, D_in, Hp, x_bytes, out_bytes, budget_bytes, weight_bytes):
    """Largest multiple-of-8 tile (<=1024 rows) whose working set fits the VMEM
    budget; shrinks only to keep >=4 grid steps when that still leaves >=512
    rows per tile (per-step overhead ~0.35us, 512-row tiles ~85% of roofline)."""
    # Rough per-row VMEM cost: double-buffered x/out tiles + f32/bf16 intermediates.
    per_row = (2 * D_in * x_bytes          # x tile, double-buffered
               + 2 * D_in * out_bytes      # out tile, double-buffered
               + 12 * Hp + 6 * D_in)       # h1/h2 (f32 + bf16) + out f32
    avail = max(budget_bytes - weight_bytes - (2 << 20), per_row * 8)
    tile = min(int(avail // per_row), 1024)
    tile = max(8, (tile // 8) * 8)
    if tile >= B:
        return B                           # single full-extent block
    steps = -(-B // tile)
    if steps < 4:
        alt = max(8, ((-(-B // 4)) // 8) * 8)
        if alt >= 512:
            tile = alt
    return tile


# ---------------------------------------------------------------------------
# Wrapper
# ---------------------------------------------------------------------------
def dr_autoencoder_forward(x, prepared, *, batch_tile=None, out_dtype=None):
    """Run the DRAutoencoder forward pass with a single fused Pallas kernel.

    Args:
      x:          [B, input_dim] array (f32, or bf16 if the surrounding model
                  natively produces bf16 activations).
      prepared:   output of prepare_params() (pre-transposed / padded / fused).
      batch_tile: rows per grid step; default derived from the VMEM budget.
      out_dtype:  output dtype; defaults to x.dtype (no extra wrapper casts).
    """
    B, D_in = x.shape
    w1t, w23, w4t = prepared["w1t"], prepared["w23"], prepared["w4t"]
    b1, b23, b4 = prepared["b1"], prepared["b23"], prepared["b4"]
    assert w1t.shape[0] == D_in, "params do not match x's feature dim"
    Hp = w1t.shape[1]
    out_dtype = x.dtype if out_dtype is None else out_dtype
    # NOTE: the out store is lane-dense (unmasked vst) only when D_in % 128 == 0;
    # other D_in are correct but pay masked partial stores every grid step.

    x_bytes = jnp.dtype(x.dtype).itemsize
    out_bytes = jnp.dtype(out_dtype).itemsize
    weight_bytes = sum(int(a.size) * jnp.dtype(a.dtype).itemsize
                       for a in (w1t, b1, w23, b23, w4t, b4))
    budget = _vmem_budget_bytes()

    if batch_tile is None:
        batch_tile = _pick_batch_tile(B, D_in, Hp, x_bytes, out_bytes,
                                      budget, weight_bytes)
    batch_tile = int(min(batch_tile, B))
    if batch_tile != B:
        assert batch_tile % 8 == 0, \
            "batch_tile must be a multiple of 8 (or the full batch)"

    grid = (pl.cdiv(B, batch_tile),)   # remainder block handled by Pallas masking
    args = (x, w1t, b1, w23, b23, w4t, b4)

    def build(single_buffer):
        def resident(shape):
            # Grid-invariant operand (weights/biases): constant index_map;
            # optionally single-buffered to halve its VMEM footprint.
            kwargs = {"pipeline_mode": pl.Buffered(1)} if single_buffer else {}
            return pl.BlockSpec(shape, lambda i: (0,) * len(shape), **kwargs)

        return pl.pallas_call(
            _autoencoder_kernel,
            out_shape=jax.ShapeDtypeStruct((B, D_in), out_dtype),
            grid=grid,
            in_specs=[
                pl.BlockSpec((batch_tile, D_in), lambda i: (i, 0)),   # x tile
                resident((D_in, Hp)), resident((1, Hp)),              # layer 1
                resident((Hp, Hp)),   resident((1, Hp)),              # fused 2+3
                resident((Hp, D_in)), resident((1, D_in)),            # layer 4
            ],
            out_specs=pl.BlockSpec((batch_tile, D_in), lambda i: (i, 0)),
            compiler_params=pltpu.CompilerParams(
                dimension_semantics=("parallel",),
                vmem_limit_bytes=int(budget)),
        )

    # Single-buffer the resident weights only when they actually matter for the
    # VMEM budget (large D_in/Hp configs, mainly relevant on v7x's 64 MiB VMEM).
    if weight_bytes > budget // 8:
        try:
            return build(True)(*args)
        except (TypeError, pltpu.LoweringException):
            pass  # pipeline_mode unsupported on this jax version -> default buffering
    return build(False)(*args)


# ---------------------------------------------------------------------------
# Parameter init (mirrors nn.Linear's U(-1/sqrt(fan_in), 1/sqrt(fan_in)))
# ---------------------------------------------------------------------------
def init_params(key, input_dim, output_dim, hidden_dim=None):
    if hidden_dim is None:
        hidden_dim = input_dim // 2

    def linear(k, fan_in, fan_out):
        kw, kb = jax.random.split(k)
        bound = 1.0 / jnp.sqrt(fan_in)
        w = jax.random.uniform(kw, (fan_out, fan_in), jnp.float32, -bound, bound)
        b = jax.random.uniform(kb, (fan_out,), jnp.float32, -bound, bound)
        return w, b

    k1, k2, k3, k4 = jax.random.split(key, 4)
    w1, b1 = linear(k1, input_dim, hidden_dim)     # encoder[0]
    w2, b2 = linear(k2, hidden_dim, output_dim)    # encoder[1]
    w3, b3 = linear(k3, output_dim, hidden_dim)    # decoder[0]
    w4, b4 = linear(k4, hidden_dim, input_dim)     # decoder[1]
    return dict(w1=w1, b1=b1, w2=w2, b2=b2, w3=w3, b3=b3, w4=w4, b4=b4)


# ---------------------------------------------------------------------------
# References for verification
# ---------------------------------------------------------------------------
def _reference_forward_f32(x, p):
    """Pure-f32 JAX reference of the PyTorch forward."""
    h1 = jax.nn.relu(x @ p["w1"].T + p["b1"])
    z = h1 @ p["w2"].T + p["b2"]
    h2 = jax.nn.relu(z @ p["w3"].T + p["b3"])
    return h2 @ p["w4"].T + p["b4"]


def _reference_forward_mixed(x, prep):
    """Same bf16-operand / f32-accumulate / fused-W23 math as the kernel."""
    xb = x.astype(jnp.bfloat16)
    h1 = jax.nn.relu(jnp.dot(xb, prep["w1t"], preferred_element_type=jnp.float32)
                     + prep["b1"]).astype(jnp.bfloat16)
    h2 = jax.nn.relu(jnp.dot(h1, prep["w23"], preferred_element_type=jnp.float32)
                     + prep["b23"]).astype(jnp.bfloat16)
    out = jnp.dot(h2, prep["w4t"], preferred_element_type=jnp.float32) + prep["b4"]
    return out.astype(x.dtype)


# TODO(synk): fit()/evaluate() (Adam training loop, MSE backward) are training
# utilities with no single-kernel Pallas equivalent; only forward() is
# implemented. The standalone reduce() latent z is not exposed by the fused
# kernel (exact fusion of the nonlinearity-free W2.W3 pair); keep the original
# w2t around if a separate reduce() kernel is ever needed.

if __name__ == "__main__":
    key = jax.random.PRNGKey(0)
    k_x, k_p = jax.random.split(key)

    # Small, lane-friendly demo config: input_dim multiple of 128 keeps the
    # output store lane-dense; hidden_dim defaults to 64 and output_dim=16,
    # both zero-padded to 128 inside prepare_params. batch=200 is deliberately
    # NOT a multiple of the explicit tile below to exercise the cdiv path.
    batch, input_dim, output_dim = 200, 128, 16
    x = jax.random.normal(k_x, (batch, input_dim), jnp.float32)
    params = init_params(k_p, input_dim, output_dim)

    # One-time parameter prep (transpose + pad + W2.W3 fusion + bf16 cast).
    prepared = prepare_params(params)

    # 1) Default, VMEM-budget-derived tile (small B -> single full-extent block).
    out = jax.block_until_ready(dr_autoencoder_forward(x, prepared))
    assert out.shape == (batch, input_dim)

    # 2) Multi-step grid with a remainder block (200 = 3*64 + 8): exercises the
    #    pipelined / partial-last-block path used for large batches.
    out_tiled = jax.block_until_ready(
        dr_autoencoder_forward(x, prepared, batch_tile=64))
    assert out_tiled.shape == (batch, input_dim)

    # Tight check vs. a plain-JAX version of the same mixed-precision math.
    ref_mixed = _reference_forward_mixed(x, prepared)
    assert jnp.allclose(out, ref_mixed, atol=2e-3, rtol=2e-3), \
        "mismatch vs mixed-precision reference (default tile)"
    assert jnp.allclose(out_tiled, ref_mixed, atol=2e-3, rtol=2e-3), \
        "mismatch vs mixed-precision reference (tiled / remainder block)"

    # Loose sanity check vs. the full-f32 PyTorch-convention reference.
    ref_f32 = _reference_forward_f32(x, params)
    assert jnp.allclose(out, ref_f32, atol=5e-2, rtol=5e-2), \
        "mismatch vs f32 reference"

    print("KERNEL_OK")
</pallas_src>

<mosaic_0001>
module attributes {stable_mosaic.version = 11 : i64} {
  func.func @_autoencoder_kernel(%arg0: i32, %arg1: memref<200x128xf32, #tpu.memory_space<vmem>>, %arg2: memref<128x128xbf16, #tpu.memory_space<vmem>>, %arg3: memref<1x128xf32, #tpu.memory_space<vmem>>, %arg4: memref<128x128xbf16, #tpu.memory_space<vmem>>, %arg5: memref<1x128xf32, #tpu.memory_space<vmem>>, %arg6: memref<128x128xbf16, #tpu.memory_space<vmem>>, %arg7: memref<1x128xf32, #tpu.memory_space<vmem>>, %arg8: memref<200x128xf32, #tpu.memory_space<vmem>>) attributes {dimension_semantics = [#tpu.dimension_semantics<parallel>], iteration_bounds = array<i64: 1>, scalar_prefetch = 0 : i64, scratch_operands = 0 : i64, tpu.core_type = #tpu.core_type<tc>, window_params = [{transform_indices = @transform_0, window_bounds = array<i64: 200, 128>}, {pipeline_mode = #tpu.pipeline_mode<synchronous>, transform_indices = @transform_1, window_bounds = array<i64: 128, 128>}, {pipeline_mode = #tpu.pipeline_mode<synchronous>, transform_indices = @transform_2, window_bounds = array<i64: 1, 128>}, {pipeline_mode = #tpu.pipeline_mode<synchronous>, transform_indices = @transform_3, window_bounds = array<i64: 128, 128>}, {pipeline_mode = #tpu.pipeline_mode<synchronous>, transform_indices = @transform_4, window_bounds = array<i64: 1, 128>}, {pipeline_mode = #tpu.pipeline_mode<synchronous>, transform_indices = @transform_5, window_bounds = array<i64: 128, 128>}, {pipeline_mode = #tpu.pipeline_mode<synchronous>, transform_indices = @transform_6, window_bounds = array<i64: 1, 128>}, {transform_indices = @transform_7, window_bounds = array<i64: 200, 128>}]} {
    %c0 = arith.constant 0 : index
    %c0_0 = arith.constant 0 : index
    %0 = vector.load %arg1[%c0, %c0_0] : memref<200x128xf32, #tpu.memory_space<vmem>>, vector<200x128xf32>
    %1 = arith.truncf %0 : vector<200x128xf32> to vector<200x128xbf16>
    %c0_1 = arith.constant 0 : index
    %c0_2 = arith.constant 0 : index
    %2 = vector.load %arg2[%c0_1, %c0_2] : memref<128x128xbf16, #tpu.memory_space<vmem>>, vector<128x128xbf16>
    %cst = arith.constant dense<0.000000e+00> : vector<200x128xf32>
    %3 = tpu.matmul %1, %2, %cst {dimension_numbers = #tpu.dot_dimension_numbers<[1], [0], [0], [1], [0, 0, 1, 1], [], []>} : vector<200x128xbf16>, vector<128x128xbf16>, vector<200x128xf32> -> vector<200x128xf32>
    %c0_3 = arith.constant 0 : index
    %c0_4 = arith.constant 0 : index
    %4 = vector.load %arg3[%c0_3, %c0_4] : memref<1x128xf32, #tpu.memory_space<vmem>>, vector<1x128xf32>
    %5 = vector.broadcast %4 : vector<1x128xf32> to vector<200x128xf32>
    %6 = arith.addf %3, %5 : vector<200x128xf32>
    %cst_5 = arith.constant 0.000000e+00 : f32
    %7 = vector.broadcast %cst_5 : f32 to vector<200x128xf32>
    %8 = arith.maximumf %6, %7 : vector<200x128xf32>
    %9 = arith.truncf %8 : vector<200x128xf32> to vector<200x128xbf16>
    %c0_6 = arith.constant 0 : index
    %c0_7 = arith.constant 0 : index
    %10 = vector.load %arg4[%c0_6, %c0_7] : memref<128x128xbf16, #tpu.memory_space<vmem>>, vector<128x128xbf16>
    %cst_8 = arith.constant dense<0.000000e+00> : vector<200x128xf32>
    %11 = tpu.matmul %9, %10, %cst_8 {dimension_numbers = #tpu.dot_dimension_numbers<[1], [0], [0], [1], [0, 0, 1, 1], [], []>} : vector<200x128xbf16>, vector<128x128xbf16>, vector<200x128xf32> -> vector<200x128xf32>
    %c0_9 = arith.constant 0 : index
    %c0_10 = arith.constant 0 : index
    %12 = vector.load %arg5[%c0_9, %c0_10] : memref<1x128xf32, #tpu.memory_space<vmem>>, vector<1x128xf32>
    %13 = vector.broadcast %12 : vector<1x128xf32> to vector<200x128xf32>
    %14 = arith.addf %11, %13 : vector<200x128xf32>
    %cst_11 = arith.constant 0.000000e+00 : f32
    %15 = vector.broadcast %cst_11 : f32 to vector<200x128xf32>
    %16 = arith.maximumf %14, %15 : vector<200x128xf32>
    %17 = arith.truncf %16 : vector<200x128xf32> to vector<200x128xbf16>
    %c0_12 = arith.constant 0 : index
    %c0_13 = arith.constant 0 : index
    %18 = vector.load %arg6[%c0_12, %c0_13] : memref<128x128xbf16, #tpu.memory_space<vmem>>, vector<128x128xbf16>
    %cst_14 = arith.constant dense<0.000000e+00> : vector<200x128xf32>
    %19 = tpu.matmul %17, %18, %cst_14 {dimension_numbers = #tpu.dot_dimension_numbers<[1], [0], [0], [1], [0, 0, 1, 1], [], []>} : vector<200x128xbf16>, vector<128x128xbf16>, vector<200x128xf32> -> vector<200x128xf32>
    %c0_15 = arith.constant 0 : index
    %c0_16 = arith.constant 0 : index
    %20 = vector.load %arg7[%c0_15, %c0_16] : memref<1x128xf32, #tpu.memory_space<vmem>>, vector<1x128xf32>
    %21 = vector.broadcast %20 : vector<1x128xf32> to vector<200x128xf32>
    %22 = arith.addf %19, %21 : vector<200x128xf32>
    %c0_17 = arith.constant 0 : index
    %c0_18 = arith.constant 0 : index
    %23 = vector.load %arg8[%c0_17, %c0_18] : memref<200x128xf32, #tpu.memory_space<vmem>>, vector<200x128xf32>
    tpu.vector_store %arg8[%c0_17, %c0_18], %22 {strides = array<i32>} : memref<200x128xf32, #tpu.memory_space<vmem>>, vector<200x128xf32>,
    return
  }
  func.func @transform_0(%arg0: i32) -> (i32, i32) {
    %c0_i32 = arith.constant 0 : i32
    %c0_i32_0 = arith.constant 0 : i32
    return %arg0, %c0_i32 : i32, i32
  }
  func.func @transform_1(%arg0: i32) -> (i32, i32) {
    %c0_i32 = arith.constant 0 : i32
    %c0_i32_0 = arith.constant 0 : i32
    %c0_i32_1 = arith.constant 0 : i32
    return %c0_i32, %c0_i32_0 : i32, i32
  }
  func.func @transform_2(%arg0: i32) -> (i32, i32) {
    %c0_i32 = arith.constant 0 : i32
    %c0_i32_0 = arith.constant 0 : i32
    %c0_i32_1 = arith.constant 0 : i32
    return %c0_i32, %c0_i32_0 : i32, i32
  }
  func.func @transform_3(%arg0: i32) -> (i32, i32) {
    %c0_i32 = arith.constant 0 : i32
    %c0_i32_0 = arith.constant 0 : i32
    %c0_i32_1 = arith.constant 0 : i32
    return %c0_i32, %c0_i32_0 : i32, i32
  }
  func.func @transform_4(%arg0: i32) -> (i32, i32) {
    %c0_i32 = arith.constant 0 : i32
    %c0_i32_0 = arith.constant 0 : i32
    %c0_i32_1 = arith.constant 0 : i32
    return %c0_i32, %c0_i32_0 : i32, i32
  }
  func.func @transform_5(%arg0: i32) -> (i32, i32) {
    %c0_i32 = arith.constant 0 : i32
    %c0_i32_0 = arith.constant 0 : i32
    %c0_i32_1 = arith.constant 0 : i32
    return %c0_i32, %c0_i32_0 : i32, i32
  }
  func.func @transform_6(%arg0: i32) -> (i32, i32) {
    %c0_i32 = arith.constant 0 : i32
    %c0_i32_0 = arith.constant 0 : i32
    %c0_i32_1 = arith.constant 0 : i32
    return %c0_i32, %c0_i32_0 : i32, i32
  }
  func.func @transform_7(%arg0: i32) -> (i32, i32) {
    %c0_i32 = arith.constant 0 : i32
    %c0_i32_0 = arith.constant 0 : i32
    return %arg0, %c0_i32 : i32, i32
  }
}

</mosaic_0001>

<llo_original>
// kernel: tpu_custom_call.1
$region0: #{tpu_custom_call.1}
  #allocation0 [shape = 'u32[]', space=smem, size = 0x4, offset = 0x4, fixed_abs, tag = 'smem constant byte address 0x4 - core index']
  #allocation1 [shape = 'u32[72,128]{1,0:T(1,128)}', space=vmem, size = 0x9000, scoped, tag = 'internal scratch']
  %s0 = inlined_call_operand.hbm [shape: f32[200,128], index: 0, kind: input, shape index: {}]
  %s1 = inlined_call_operand.hbm [shape: bf16[128,128], index: 1, kind: input, shape index: {}]
  %s2 = inlined_call_operand.vmem [shape: f32[1,128], index: 2, kind: input, shape index: {}]
  %s3 = inlined_call_operand.hbm [shape: bf16[128,128], index: 3, kind: input, shape index: {}]
  %s4 = inlined_call_operand.vmem [shape: f32[1,128], index: 4, kind: input, shape index: {}]
  %s5 = inlined_call_operand.hbm [shape: bf16[128,128], index: 5, kind: input, shape index: {}]
  %s6 = inlined_call_operand.vmem [shape: f32[1,128], index: 6, kind: input, shape index: {}]
  %s7 = inlined_call_operand.hbm [shape: f32[200,128], index: 7, kind: output, shape index: {}]
  %s8 = sld [smem:[#allocation0]]
  $region54: #{tpu_custom_call.1} parent=0
    _
  %s10 = ssub.s32 1, %s8
  %s11 = scalar_select 0, %s10, %s8
  $region1: #{tpu_custom_call.1} parent=0
    #allocation2 [shape = 'u8[102400]{0}', space=vmem, size = 0x19000, scoped, tag = 'input window, operand 0, single buffered']
    #allocation3 [shape = 's32[1]{0}', space=sflag, size = 0x4, scoped, tag = 'scoped memory for tpu_custom_call.1']
    #allocation4 [shape = 's32[1]{0}', space=sflag, size = 0x4, scoped, tag = 'scoped memory for tpu_custom_call.1']
    #allocation5 [shape = 'u8[32768]{0}', space=vmem, size = 0x8000, scoped, tag = 'input window, operand 1, single buffered']
    #allocation6 [shape = 's32[1]{0}', space=sflag, size = 0x4, scoped, tag = 'scoped memory for tpu_custom_call.1']
    #allocation7 [shape = 'u8[32768]{0}', space=vmem, size = 0x8000, scoped, tag = 'input window, operand 3, single buffered']
    #allocation8 [shape = 'u8[32768]{0}', space=vmem, size = 0x8000, scoped, tag = 'input window, operand 5, single buffered']
    #allocation9 [shape = 's32[1]{0}', space=sflag, size = 0x4, scoped, tag = 'scoped memory for tpu_custom_call.1']
    #allocation10 [shape = 'u8[102400]{0}', space=vmem, size = 0x19000, scoped, tag = 'output window, operand 0, single buffered']
    %12 = vsyncpa [#allocation3], 0
    %13 = vsyncpa [#allocation6], 0
    %14 = vsyncpa [#allocation9], 0
    %15 = vsyncpa [#allocation4], 0
    // Predicated region
    $region2: #{tpu_custom_call.1} parent=1 // pred_check
      _
    $region3: #{tpu_custom_call.1} parent=1 // pred_check_branch
      %17 = sbr.rel (0) target = $region5
    $region4: #{tpu_custom_call.1} parent=1 // pred_region
      %19 = vsyncadd [#allocation3], 0
      %s20 = sshll.u32 %s0, 4
      %s21 = int_to_ptr.hbm [resolvable:$true] %s20
      %s22 = sshll.u32 [#allocation2], 4
      %s23 = int_to_ptr.vmem [resolvable:$true] %s22
      %28 = dma.hbm_to_vmem [thread:$0]  %s21, 3200, %s23, [#allocation3], 128, 128, 8
    $region5: #{tpu_custom_call.1} parent=1 // pred_fallthru
      _
    // Predicated region
    $region6: #{tpu_custom_call.1} parent=1 // pred_check
      _
    $region7: #{tpu_custom_call.1} parent=1 // pred_check_branch
      %30 = sbr.rel (0) target = $region9
    $region8: #{tpu_custom_call.1} parent=1 // pred_region
      %32 = vsyncadd [#allocation6], 0
      %s33 = sshll.u32 %s1, 4
      %s34 = int_to_ptr.hbm [resolvable:$true] %s33
      %s35 = sshll.u32 [#allocation5], 4
      %s36 = int_to_ptr.vmem [resolvable:$true] %s35
      %41 = dma.hbm_to_vmem [thread:$0]  %s34, 1024, %s36, [#allocation6], 64, 64, 4
    $region9: #{tpu_custom_call.1} parent=1 // pred_fallthru
      _
    // Predicated region
    $region10: #{tpu_custom_call.1} parent=1 // pred_check
      _
    $region11: #{tpu_custom_call.1} parent=1 // pred_check_branch
      %43 = sbr.rel (0) target = $region13
    $region12: #{tpu_custom_call.1} parent=1 // pred_region
      _
    $region13: #{tpu_custom_call.1} parent=1 // pred_fallthru
      _
    // Predicated region
    $region14: #{tpu_custom_call.1} parent=1 // pred_check
      _
    $region15: #{tpu_custom_call.1} parent=1 // pred_check_branch
      %45 = sbr.rel (0) target = $region17
    $region16: #{tpu_custom_call.1} parent=1 // pred_region
      %47 = vsyncadd [#allocation6], 0
      %s48 = sshll.u32 %s3, 4
      %s49 = int_to_ptr.hbm [resolvable:$true] %s48
      %s50 = sshll.u32 [#allocation7], 4
      %s51 = int_to_ptr.vmem [resolvable:$true] %s50
      %56 = dma.hbm_to_vmem [thread:$0]  %s49, 1024, %s51, [#allocation6], 64, 64, 4
    $region17: #{tpu_custom_call.1} parent=1 // pred_fallthru
      _
    // Predicated region
    $region18: #{tpu_custom_call.1} parent=1 // pred_check
      _
    $region19: #{tpu_custom_call.1} parent=1 // pred_check_branch
      %58 = sbr.rel (0) target = $region21
    $region20: #{tpu_custom_call.1} parent=1 // pred_region
      _
    $region21: #{tpu_custom_call.1} parent=1 // pred_fallthru
      _
    // Predicated region
    $region22: #{tpu_custom_call.1} parent=1 // pred_check
      _
    $region23: #{tpu_custom_call.1} parent=1 // pred_check_branch
      %60 = sbr.rel (0) target = $region25
    $region24: #{tpu_custom_call.1} parent=1 // pred_region
      %62 = vsyncadd [#allocation9], 0
      %s63 = sshll.u32 %s5, 4
      %s64 = int_to_ptr.hbm [resolvable:$true] %s63
      %s65 = sshll.u32 [#allocation8], 4
      %s66 = int_to_ptr.vmem [resolvable:$true] %s65
      %71 = dma.hbm_to_vmem [thread:$0]  %s64, 1024, %s66, [#allocation9], 64, 64, 4
    $region25: #{tpu_custom_call.1} parent=1 // pred_fallthru
      _
    // Predicated region
    $region26: #{tpu_custom_call.1} parent=1 // pred_check
      _
    $region27: #{tpu_custom_call.1} parent=1 // pred_check_branch
      %73 = sbr.rel (0) target = $region29
    $region28: #{tpu_custom_call.1} parent=1 // pred_region
      _
    $region29: #{tpu_custom_call.1} parent=1 // pred_fallthru
      _
    // Predicated region
    $region30: #{tpu_custom_call.1} parent=1 // pred_check
      _
    $region31: #{tpu_custom_call.1} parent=1 // pred_check_branch
      %75 = sbr.rel (0) target = $region33
    $region32: #{tpu_custom_call.1} parent=1 // pred_region
      %77 = dma.done [#allocation3], 3200
    $region33: #{tpu_custom_call.1} parent=1 // pred_fallthru
      _
    // Predicated region
    $region34: #{tpu_custom_call.1} parent=1 // pred_check
      _
    $region35: #{tpu_custom_call.1} parent=1 // pred_check_branch
      %79 = sbr.rel (0) target = $region37
    $region36: #{tpu_custom_call.1} parent=1 // pred_region
      %81 = dma.done [#allocation6], 1024
    $region37: #{tpu_custom_call.1} parent=1 // pred_fallthru
      _
    // Predicated region
    $region38: #{tpu_custom_call.1} parent=1 // pred_check
      _
    $region39: #{tpu_custom_call.1} parent=1 // pred_check_branch
      %83 = sbr.rel (0) target = $region41
    $region40: #{tpu_custom_call.1} parent=1 // pred_region
      %85 = dma.done [#allocation6], 1024
    $region41: #{tpu_custom_call.1} parent=1 // pred_fallthru
      _
    // Predicated region
    $region42: #{tpu_custom_call.1} parent=1 // pred_check
      _
    $region43: #{tpu_custom_call.1} parent=1 // pred_check_branch
      %87 = sbr.rel (0) target = $region45
    $region44: #{tpu_custom_call.1} parent=1 // pred_region
      %89 = dma.done [#allocation9], 1024
    $region45: #{tpu_custom_call.1} parent=1 // pred_fallthru
      _
    %v90 = vld [vmem:[#allocation2] sm:$0xff]
    %v91 = vld [vmem:[#allocation2 + $0x8] sm:$0xff]
    %v92 = vld [vmem:[#allocation2 + $0x10] sm:$0xff]
    %v93 = vld [vmem:[#allocation2 + $0x18] sm:$0xff]
    %v94 = vld [vmem:[#allocation2 + $0x20] sm:$0xff]
    %v95 = vld [vmem:[#allocation2 + $0x28] sm:$0xff]
    %v96 = vld [vmem:[#allocation2 + $0x30] sm:$0xff]
    %v97 = vld [vmem:[#allocation2 + $0x38] sm:$0xff]
    %v98 = vld [vmem:[#allocation2 + $0x40] sm:$0xff]
    %v99 = vld [vmem:[#allocation2 + $0x48] sm:$0xff]
    %v100 = vld [vmem:[#allocation2 + $0x50] sm:$0xff]
    %v101 = vld [vmem:[#allocation2 + $0x58] sm:$0xff]
    %v102 = vld [vmem:[#allocation2 + $0x60] sm:$0xff]
    %v103 = vld [vmem:[#allocation2 + $0x68] sm:$0xff]
    %v104 = vld [vmem:[#allocation2 + $0x70] sm:$0xff]
    %v105 = vld [vmem:[#allocation2 + $0x78] sm:$0xff]
    %v106 = vld [vmem:[#allocation2 + $0x80] sm:$0xff]
    %v107 = vld [vmem:[#allocation2 + $0x88] sm:$0xff]
    %v108 = vld [vmem:[#allocation2 + $0x90] sm:$0xff]
    %v109 = vld [vmem:[#allocation2 + $0x98] sm:$0xff]
    %v110 = vld [vmem:[#allocation2 + $0xa0] sm:$0xff]
    %v111 = vld [vmem:[#allocation2 + $0xa8] sm:$0xff]
    %v112 = vld [vmem:[#allocation2 + $0xb0] sm:$0xff]
    %v113 = vld [vmem:[#allocation2 + $0xb8] sm:$0xff]
    %v114 = vld [vmem:[#allocation2 + $0xc0] sm:$0xff]
    %v115 = vpack.c.bf16 %v91, %v90
    %v116 = vpack.c.bf16 %v93, %v92
    %v117 = vpack.c.bf16 %v95, %v94
    %v118 = vpack.c.bf16 %v97, %v96
    %v119 = vpack.c.bf16 %v99, %v98
    %v120 = vpack.c.bf16 %v101, %v100
    %v121 = vpack.c.bf16 %v103, %v102
    %v122 = vpack.c.bf16 %v105, %v104
    %v123 = vpack.c.bf16 %v107, %v106
    %v124 = vpack.c.bf16 %v109, %v108
    %v125 = vpack.c.bf16 %v111, %v110
    %v126 = vpack.c.bf16 %v113, %v112
    %v127 = vpack.c.bf16 %v114, %v114
    %v128 = vld [vmem:[#allocation5] sm:$0xf]
    %v129 = vld [vmem:[#allocation5 + $0x4] sm:$0xf]
    %v130 = vld [vmem:[#allocation5 + $0x8] sm:$0xf]
    %v131 = vld [vmem:[#allocation5 + $0xc] sm:$0xf]
    %v132 = vld [vmem:[#allocation5 + $0x10] sm:$0xf]
    %v133 = vld [vmem:[#allocation5 + $0x14] sm:$0xf]
    %v134 = vld [vmem:[#allocation5 + $0x18] sm:$0xf]
    %v135 = vld [vmem:[#allocation5 + $0x1c] sm:$0xf]
    %v136 = vld [vmem:[#allocation5 + $0x20] sm:$0xf]
    %v137 = vld [vmem:[#allocation5 + $0x24] sm:$0xf]
    %v138 = vld [vmem:[#allocation5 + $0x28] sm:$0xf]
    %v139 = vld [vmem:[#allocation5 + $0x2c] sm:$0xf]
    %v140 = vld [vmem:[#allocation5 + $0x30] sm:$0xf]
    %v141 = vld [vmem:[#allocation5 + $0x34] sm:$0xf]
    %v142 = vld [vmem:[#allocation5 + $0x38] sm:$0xf]
    %v143 = vld [vmem:[#allocation5 + $0x3c] sm:$0xf]
    %v144 = vld [vmem:[%s2] sm:$0x1]
    %v146 = vperm.slane %v144, 0
    %v164 = vunpack.c.l.b16 %v128
    %v165 = vunpack.c.l.b16 %v129
    %v166 = vunpack.c.l.b16 %v130
    %v167 = vunpack.c.l.b16 %v131
    %v168 = vunpack.c.l.b16 %v132
    %v169 = vunpack.c.l.b16 %v133
    %v170 = vunpack.c.l.b16 %v134
    %v171 = vunpack.c.l.b16 %v135
    %v172 = vunpack.c.l.b16 %v136
    %v173 = vunpack.c.l.b16 %v137
    %v174 = vunpack.c.l.b16 %v138
    %v175 = vunpack.c.l.b16 %v139
    %v176 = vunpack.c.l.b16 %v140
    %v177 = vunpack.c.l.b16 %v141
    %v178 = vunpack.c.l.b16 %v142
    %v179 = vunpack.c.l.b16 %v143
    %v180 = vpack.c.b16 %v165, %v164
    %v181 = vpack.c.b16 %v167, %v166
    %v182 = vpack.c.b16 %v169, %v168
    %v183 = vpack.c.b16 %v171, %v170
    %v184 = vpack.c.b16 %v173, %v172
    %v185 = vpack.c.b16 %v175, %v174
    %v186 = vpack.c.b16 %v177, %v176
    %v187 = vpack.c.b16 %v179, %v178
    %196 = vmatpush.bf16.msra.mxu0 %v187
    %197 = vmatpush.bf16.msra.mxu0 %v186
    %198 = vmatpush.bf16.msra.mxu0 %v185
    %199 = vmatpush.bf16.msra.mxu0 %v184
    %200 = vmatpush.bf16.msra.mxu0 %v183
    %201 = vmatpush.bf16.msra.mxu0 %v182
    %202 = vmatpush.bf16.msra.mxu0 %v181
    %203 = vmatpush.bf16.msra.mxu0 %v180
    %204 = vmatmul.bf16.gmra.mxu0 %v115
    %v205 = vpop.f32.mrf.mxu0
    %v206 = vadd.f32 %v146, %v205
    %v207 = vpop.f32.mrf.mxu0
    %v208 = vadd.f32 %v146, %v207
    %209 = vmatmul.bf16.gmra.mxu0 %v116
    %v210 = vpop.f32.mrf.mxu0
    %v211 = vadd.f32 %v146, %v210
    %v212 = vpop.f32.mrf.mxu0
    %v213 = vadd.f32 %v146, %v212
    %214 = vmatmul.bf16.gmra.mxu0 %v117
    %v215 = vpop.f32.mrf.mxu0
    %v216 = vadd.f32 %v146, %v215
    %v217 = vpop.f32.mrf.mxu0
    %v218 = vadd.f32 %v146, %v217
    %219 = vmatmul.bf16.gmra.mxu0 %v118
    %v220 = vpop.f32.mrf.mxu0
    %v221 = vadd.f32 %v146, %v220
    %v222 = vpop.f32.mrf.mxu0
    %v223 = vadd.f32 %v146, %v222
    %224 = vmatmul.bf16.gmra.mxu0 %v119
    %v225 = vpop.f32.mrf.mxu0
    %v226 = vadd.f32 %v146, %v225
    %v227 = vpop.f32.mrf.mxu0
    %v228 = vadd.f32 %v146, %v227
    %229 = vmatmul.bf16.gmra.mxu0 %v120
    %v230 = vpop.f32.mrf.mxu0
    %v231 = vadd.f32 %v146, %v230
    %v232 = vpop.f32.mrf.mxu0
    %v233 = vadd.f32 %v146, %v232
    %234 = vmatmul.bf16.gmra.mxu0 %v121
    %v235 = vpop.f32.mrf.mxu0
    %v236 = vadd.f32 %v146, %v235
    %v237 = vpop.f32.mrf.mxu0
    %v238 = vadd.f32 %v146, %v237
    %239 = vmatmul.bf16.gmra.mxu0 %v122
    %v240 = vpop.f32.mrf.mxu0
    %v241 = vadd.f32 %v146, %v240
    %v242 = vpop.f32.mrf.mxu0
    %v243 = vadd.f32 %v146, %v242
    %244 = vmatmul.bf16.gmra.mxu0 %v123
    %v245 = vpop.f32.mrf.mxu0
    %v246 = vadd.f32 %v146, %v245
    %v247 = vpop.f32.mrf.mxu0
    %v248 = vadd.f32 %v146, %v247
    %249 = vmatmul.bf16.gmra.mxu0 %v124
    %v250 = vpop.f32.mrf.mxu0
    %v251 = vadd.f32 %v146, %v250
    %v252 = vpop.f32.mrf.mxu0
    %v253 = vadd.f32 %v146, %v252
    %254 = vmatmul.bf16.gmra.mxu0 %v125
    %v255 = vpop.f32.mrf.mxu0
    %v256 = vadd.f32 %v146, %v255
    %v257 = vpop.f32.mrf.mxu0
    %v258 = vadd.f32 %v146, %v257
    %259 = vmatmul.bf16.gmra.mxu0 %v126
    %v260 = vpop.f32.mrf.mxu0
    %v261 = vadd.f32 %v146, %v260
    %v262 = vpop.f32.mrf.mxu0
    %v263 = vadd.f32 %v146, %v262
    %264 = vmatmul.bf16.gmra.mxu0 %v127
    %v265 = vpop.f32.mrf.mxu0
    %v266 = vadd.f32 %v146, %v265
    %v267 = vpop.f32.mrf.mxu0
    %268 = vdwg.mxu0
    %v269 = vmax.f32 %v206, 0.0
    %v270 = vmax.f32 %v208, 0.0
    %v271 = vmax.f32 %v211, 0.0
    %v272 = vmax.f32 %v213, 0.0
    %v273 = vmax.f32 %v216, 0.0
    %v274 = vmax.f32 %v218, 0.0
    %v275 = vmax.f32 %v221, 0.0
    %v276 = vmax.f32 %v223, 0.0
    %v277 = vmax.f32 %v226, 0.0
    %v278 = vmax.f32 %v228, 0.0
    %v279 = vmax.f32 %v231, 0.0
    %v280 = vmax.f32 %v233, 0.0
    %v281 = vmax.f32 %v236, 0.0
    %v282 = vmax.f32 %v238, 0.0
    %v283 = vmax.f32 %v241, 0.0
    %v284 = vmax.f32 %v243, 0.0
    %v285 = vmax.f32 %v246, 0.0
    %v286 = vmax.f32 %v248, 0.0
    %v287 = vmax.f32 %v251, 0.0
    %v288 = vmax.f32 %v253, 0.0
    %v289 = vmax.f32 %v256, 0.0
    %v290 = vmax.f32 %v258, 0.0
    %v291 = vmax.f32 %v261, 0.0
    %v292 = vmax.f32 %v263, 0.0
    %v293 = vmax.f32 %v266, 0.0
    %v294 = vpack.c.bf16 %v270, %v269
    %v295 = vpack.c.bf16 %v272, %v271
    %v296 = vpack.c.bf16 %v274, %v273
    %v297 = vpack.c.bf16 %v276, %v275
    %v298 = vpack.c.bf16 %v278, %v277
    %v299 = vpack.c.bf16 %v280, %v279
    %v300 = vpack.c.bf16 %v282, %v281
    %v301 = vpack.c.bf16 %v284, %v283
    %v302 = vpack.c.bf16 %v286, %v285
    %v303 = vpack.c.bf16 %v288, %v287
    %v304 = vpack.c.bf16 %v290, %v289
    %v305 = vpack.c.bf16 %v292, %v291
    %v306 = vpack.c.bf16 %v293, %v293
    %v307 = vld [vmem:[#allocation7] sm:$0xf]
    %v308 = vld [vmem:[#allocation7 + $0x4] sm:$0xf]
    %v309 = vld [vmem:[#allocation7 + $0x8] sm:$0xf]
    %v310 = vld [vmem:[#allocation7 + $0xc] sm:$0xf]
    %v311 = vld [vmem:[#allocation7 + $0x10] sm:$0xf]
    %v312 = vld [vmem:[#allocation7 + $0x14] sm:$0xf]
    %v313 = vld [vmem:[#allocation7 + $0x18] sm:$0xf]
    %v314 = vld [vmem:[#allocation7 + $0x1c] sm:$0xf]
    %v315 = vld [vmem:[#allocation7 + $0x20] sm:$0xf]
    %v316 = vld [vmem:[#allocation7 + $0x24] sm:$0xf]
    %v317 = vld [vmem:[#allocation7 + $0x28] sm:$0xf]
    %v318 = vld [vmem:[#allocation7 + $0x2c] sm:$0xf]
    %v319 = vld [vmem:[#allocation7 + $0x30] sm:$0xf]
    %v320 = vld [vmem:[#allocation7 + $0x34] sm:$0xf]
    %v321 = vld [vmem:[#allocation7 + $0x38] sm:$0xf]
    %v322 = vld [vmem:[#allocation7 + $0x3c] sm:$0xf]
    %v323 = vld [vmem:[%s4] sm:$0x1]
    %v325 = vperm.slane %v323, 0
    %v343 = vunpack.c.l.b16 %v307
    %v344 = vunpack.c.l.b16 %v308
    %v345 = vunpack.c.l.b16 %v309
    %v346 = vunpack.c.l.b16 %v310
    %v347 = vunpack.c.l.b16 %v311
    %v348 = vunpack.c.l.b16 %v312
    %v349 = vunpack.c.l.b16 %v313
    %v350 = vunpack.c.l.b16 %v314
    %v351 = vunpack.c.l.b16 %v315
    %v352 = vunpack.c.l.b16 %v316
    %v353 = vunpack.c.l.b16 %v317
    %v354 = vunpack.c.l.b16 %v318
    %v355 = vunpack.c.l.b16 %v319
    %v356 = vunpack.c.l.b16 %v320
    %v357 = vunpack.c.l.b16 %v321
    %v358 = vunpack.c.l.b16 %v322
    %v359 = vpack.c.b16 %v344, %v343
    %v360 = vpack.c.b16 %v346, %v345
    %v361 = vpack.c.b16 %v348, %v347
    %v362 = vpack.c.b16 %v350, %v349
    %v363 = vpack.c.b16 %v352, %v351
    %v364 = vpack.c.b16 %v354, %v353
    %v365 = vpack.c.b16 %v356, %v355
    %v366 = vpack.c.b16 %v358, %v357
    %375 = vmatpush.bf16.msra.mxu0 %v366
    %376 = vmatpush.bf16.msra.mxu0 %v365
    %377 = vmatpush.bf16.msra.mxu0 %v364
    %378 = vmatpush.bf16.msra.mxu0 %v363
    %379 = vmatpush.bf16.msra.mxu0 %v362
    %380 = vmatpush.bf16.msra.mxu0 %v361
    %381 = vmatpush.bf16.msra.mxu0 %v360
    %382 = vmatpush.bf16.msra.mxu0 %v359
    %383 = vmatmul.bf16.gmra.mxu0 %v294
    %v384 = vpop.f32.mrf.mxu0
    %v385 = vadd.f32 %v325, %v384
    %v386 = vpop.f32.mrf.mxu0
    %v387 = vadd.f32 %v325, %v386
    %388 = vmatmul.bf16.gmra.mxu0 %v295
    %v389 = vpop.f32.mrf.mxu0
    %v390 = vadd.f32 %v325, %v389
    %v391 = vpop.f32.mrf.mxu0
    %v392 = vadd.f32 %v325, %v391
    %393 = vmatmul.bf16.gmra.mxu0 %v296
    %v394 = vpop.f32.mrf.mxu0
    %v395 = vadd.f32 %v325, %v394
    %v396 = vpop.f32.mrf.mxu0
    %v397 = vadd.f32 %v325, %v396
    %398 = vmatmul.bf16.gmra.mxu0 %v297
    %v399 = vpop.f32.mrf.mxu0
    %v400 = vadd.f32 %v325, %v399
    %v401 = vpop.f32.mrf.mxu0
    %v402 = vadd.f32 %v325, %v401
    %403 = vmatmul.bf16.gmra.mxu0 %v298
    %v404 = vpop.f32.mrf.mxu0
    %v405 = vadd.f32 %v325, %v404
    %v406 = vpop.f32.mrf.mxu0
    %v407 = vadd.f32 %v325, %v406
    %408 = vmatmul.bf16.gmra.mxu0 %v299
    %v409 = vpop.f32.mrf.mxu0
    %v410 = vadd.f32 %v325, %v409
    %v411 = vpop.f32.mrf.mxu0
    %v412 = vadd.f32 %v325, %v411
    %413 = vmatmul.bf16.gmra.mxu0 %v300
    %v414 = vpop.f32.mrf.mxu0
    %v415 = vadd.f32 %v325, %v414
    %v416 = vpop.f32.mrf.mxu0
    %v417 = vadd.f32 %v325, %v416
    %418 = vmatmul.bf16.gmra.mxu0 %v301
    %v419 = vpop.f32.mrf.mxu0
    %v420 = vadd.f32 %v325, %v419
    %v421 = vpop.f32.mrf.mxu0
    %v422 = vadd.f32 %v325, %v421
    %423 = vmatmul.bf16.gmra.mxu0 %v302
    %v424 = vpop.f32.mrf.mxu0
    %v425 = vadd.f32 %v325, %v424
    %v426 = vpop.f32.mrf.mxu0
    %v427 = vadd.f32 %v325, %v426
    %428 = vmatmul.bf16.gmra.mxu0 %v303
    %v429 = vpop.f32.mrf.mxu0
    %v430 = vadd.f32 %v325, %v429
    %v431 = vpop.f32.mrf.mxu0
    %v432 = vadd.f32 %v325, %v431
    %433 = vmatmul.bf16.gmra.mxu0 %v304
    %v434 = vpop.f32.mrf.mxu0
    %v435 = vadd.f32 %v325, %v434
    %v436 = vpop.f32.mrf.mxu0
    %v437 = vadd.f32 %v325, %v436
    %438 = vmatmul.bf16.gmra.mxu0 %v305
    %v439 = vpop.f32.mrf.mxu0
    %v440 = vadd.f32 %v325, %v439
    %v441 = vpop.f32.mrf.mxu0
    %v442 = vadd.f32 %v325, %v441
    %443 = vmatmul.bf16.gmra.mxu0 %v306
    %v444 = vpop.f32.mrf.mxu0
    %v445 = vadd.f32 %v325, %v444
    %v446 = vpop.f32.mrf.mxu0
    %447 = vdwg.mxu0
    %v448 = vmax.f32 %v385, 0.0
    %v449 = vmax.f32 %v387, 0.0
    %v450 = vmax.f32 %v390, 0.0
    %v451 = vmax.f32 %v392, 0.0
    %v452 = vmax.f32 %v395, 0.0
    %v453 = vmax.f32 %v397, 0.0
    %v454 = vmax.f32 %v400, 0.0
    %v455 = vmax.f32 %v402, 0.0
    %v456 = vmax.f32 %v405, 0.0
    %v457 = vmax.f32 %v407, 0.0
    %v458 = vmax.f32 %v410, 0.0
    %v459 = vmax.f32 %v412, 0.0
    %v460 = vmax.f32 %v415, 0.0
    %v461 = vmax.f32 %v417, 0.0
    %v462 = vmax.f32 %v420, 0.0
    %v463 = vmax.f32 %v422, 0.0
    %v464 = vmax.f32 %v425, 0.0
    %v465 = vmax.f32 %v427, 0.0
    %v466 = vmax.f32 %v430, 0.0
    %v467 = vmax.f32 %v432, 0.0
    %v468 = vmax.f32 %v435, 0.0
    %v469 = vmax.f32 %v437, 0.0
    %v470 = vmax.f32 %v440, 0.0
    %v471 = vmax.f32 %v442, 0.0
    %v472 = vmax.f32 %v445, 0.0
    %v473 = vpack.c.bf16 %v449, %v448
    %v474 = vpack.c.bf16 %v451, %v450
    %v475 = vpack.c.bf16 %v453, %v452
    %v476 = vpack.c.bf16 %v455, %v454
    %v477 = vpack.c.bf16 %v457, %v456
    %v478 = vpack.c.bf16 %v459, %v458
    %v479 = vpack.c.bf16 %v461, %v460
    %v480 = vpack.c.bf16 %v463, %v462
    %v481 = vpack.c.bf16 %v465, %v464
    %v482 = vpack.c.bf16 %v467, %v466
    %v483 = vpack.c.bf16 %v469, %v468
    %v484 = vpack.c.bf16 %v471, %v470
    %v485 = vpack.c.bf16 %v472, %v472
    %v486 = vld [vmem:[#allocation8] sm:$0xf]
    %v487 = vld [vmem:[#allocation8 + $0x4] sm:$0xf]
    %v488 = vld [vmem:[#allocation8 + $0x8] sm:$0xf]
    %v489 = vld [vmem:[#allocation8 + $0xc] sm:$0xf]
    %v490 = vld [vmem:[#allocation8 + $0x10] sm:$0xf]
    %v491 = vld [vmem:[#allocation8 + $0x14] sm:$0xf]
    %v492 = vld [vmem:[#allocation8 + $0x18] sm:$0xf]
    %v493 = vld [vmem:[#allocation8 + $0x1c] sm:$0xf]
    %v494 = vld [vmem:[#allocation8 + $0x20] sm:$0xf]
    %v495 = vld [vmem:[#allocation8 + $0x24] sm:$0xf]
    %v496 = vld [vmem:[#allocation8 + $0x28] sm:$0xf]
    %v497 = vld [vmem:[#allocation8 + $0x2c] sm:$0xf]
    %v498 = vld [vmem:[#allocation8 + $0x30] sm:$0xf]
    %v499 = vld [vmem:[#allocation8 + $0x34] sm:$0xf]
    %v500 = vld [vmem:[#allocation8 + $0x38] sm:$0xf]
    %v501 = vld [vmem:[#allocation8 + $0x3c] sm:$0xf]
    %v502 = vld [vmem:[%s6] sm:$0x1]
    %v504 = vperm.slane %v502, 0
    %v522 = vunpack.c.l.b16 %v486
    %v523 = vunpack.c.l.b16 %v487
    %v524 = vunpack.c.l.b16 %v488
    %v525 = vunpack.c.l.b16 %v489
    %v526 = vunpack.c.l.b16 %v490
    %v527 = vunpack.c.l.b16 %v491
    %v528 = vunpack.c.l.b16 %v492
    %v529 = vunpack.c.l.b16 %v493
    %v530 = vunpack.c.l.b16 %v494
    %v531 = vunpack.c.l.b16 %v495
    %v532 = vunpack.c.l.b16 %v496
    %v533 = vunpack.c.l.b16 %v497
    %v534 = vunpack.c.l.b16 %v498
    %v535 = vunpack.c.l.b16 %v499
    %v536 = vunpack.c.l.b16 %v500
    %v537 = vunpack.c.l.b16 %v501
    %v538 = vpack.c.b16 %v523, %v522
    %v539 = vpack.c.b16 %v525, %v524
    %v540 = vpack.c.b16 %v527, %v526
    %v541 = vpack.c.b16 %v529, %v528
    %v542 = vpack.c.b16 %v531, %v530
    %v543 = vpack.c.b16 %v533, %v532
    %v544 = vpack.c.b16 %v535, %v534
    %v545 = vpack.c.b16 %v537, %v536
    %554 = vmatpush.bf16.msra.mxu0 %v545
    %555 = vmatpush.bf16.msra.mxu0 %v544
    %556 = vmatpush.bf16.msra.mxu0 %v543
    %557 = vmatpush.bf16.msra.mxu0 %v542
    %558 = vmatpush.bf16.msra.mxu0 %v541
    %559 = vmatpush.bf16.msra.mxu0 %v540
    %560 = vmatpush.bf16.msra.mxu0 %v539
    %561 = vmatpush.bf16.msra.mxu0 %v538
    %562 = vmatmul.bf16.gmra.mxu0 %v473
    %v563 = vpop.f32.mrf.mxu0
    %v564 = vadd.f32 %v504, %v563
    %v565 = vpop.f32.mrf.mxu0
    %v566 = vadd.f32 %v504, %v565
    %567 = vmatmul.bf16.gmra.mxu0 %v474
    %v568 = vpop.f32.mrf.mxu0
    %v569 = vadd.f32 %v504, %v568
    %v570 = vpop.f32.mrf.mxu0
    %v571 = vadd.f32 %v504, %v570
    %572 = vmatmul.bf16.gmra.mxu0 %v475
    %v573 = vpop.f32.mrf.mxu0
    %v574 = vadd.f32 %v504, %v573
    %v575 = vpop.f32.mrf.mxu0
    %v576 = vadd.f32 %v504, %v575
    %577 = vmatmul.bf16.gmra.mxu0 %v476
    %v578 = vpop.f32.mrf.mxu0
    %v579 = vadd.f32 %v504, %v578
    %v580 = vpop.f32.mrf.mxu0
    %v581 = vadd.f32 %v504, %v580
    %582 = vmatmul.bf16.gmra.mxu0 %v477
    %v583 = vpop.f32.mrf.mxu0
    %v584 = vadd.f32 %v504, %v583
    %v585 = vpop.f32.mrf.mxu0
    %v586 = vadd.f32 %v504, %v585
    %587 = vmatmul.bf16.gmra.mxu0 %v478
    %v588 = vpop.f32.mrf.mxu0
    %v589 = vadd.f32 %v504, %v588
    %v590 = vpop.f32.mrf.mxu0
    %v591 = vadd.f32 %v504, %v590
    %592 = vmatmul.bf16.gmra.mxu0 %v479
    %v593 = vpop.f32.mrf.mxu0
    %v594 = vadd.f32 %v504, %v593
    %v595 = vpop.f32.mrf.mxu0
    %v596 = vadd.f32 %v504, %v595
    %597 = vmatmul.bf16.gmra.mxu0 %v480
    %v598 = vpop.f32.mrf.mxu0
    %v599 = vadd.f32 %v504, %v598
    %v600 = vpop.f32.mrf.mxu0
    %v601 = vadd.f32 %v504, %v600
    %602 = vmatmul.bf16.gmra.mxu0 %v481
    %v603 = vpop.f32.mrf.mxu0
    %v604 = vadd.f32 %v504, %v603
    %v605 = vpop.f32.mrf.mxu0
    %v606 = vadd.f32 %v504, %v605
    %607 = vmatmul.bf16.gmra.mxu0 %v482
    %v608 = vpop.f32.mrf.mxu0
    %v609 = vadd.f32 %v504, %v608
    %v610 = vpop.f32.mrf.mxu0
    %v611 = vadd.f32 %v504, %v610
    %612 = vmatmul.bf16.gmra.mxu0 %v483
    %v613 = vpop.f32.mrf.mxu0
    %v614 = vadd.f32 %v504, %v613
    %v615 = vpop.f32.mrf.mxu0
    %v616 = vadd.f32 %v504, %v615
    %617 = vmatmul.bf16.gmra.mxu0 %v484
    %v618 = vpop.f32.mrf.mxu0
    %v619 = vadd.f32 %v504, %v618
    %v620 = vpop.f32.mrf.mxu0
    %v621 = vadd.f32 %v504, %v620
    %622 = vmatmul.bf16.gmra.mxu0 %v485
    %v623 = vpop.f32.mrf.mxu0
    %v624 = vadd.f32 %v504, %v623
    %v625 = vpop.f32.mrf.mxu0
    %626 = vdwg.mxu0
    %627 = vst [vmem:[#allocation10] sm:$0xff] %v564
    %628 = vst [vmem:[#allocation10 + $0x8] sm:$0xff] %v566
    %629 = vst [vmem:[#allocation10 + $0x10] sm:$0xff] %v569
    %630 = vst [vmem:[#allocation10 + $0x18] sm:$0xff] %v571
    %631 = vst [vmem:[#allocation10 + $0x20] sm:$0xff] %v574
    %632 = vst [vmem:[#allocation10 + $0x28] sm:$0xff] %v576
    %633 = vst [vmem:[#allocation10 + $0x30] sm:$0xff] %v579
    %634 = vst [vmem:[#allocation10 + $0x38] sm:$0xff] %v581
    %635 = vst [vmem:[#allocation10 + $0x40] sm:$0xff] %v584
    %636 = vst [vmem:[#allocation10 + $0x48] sm:$0xff] %v586
    %637 = vst [vmem:[#allocation10 + $0x50] sm:$0xff] %v589
    %638 = vst [vmem:[#allocation10 + $0x58] sm:$0xff] %v591
    %639 = vst [vmem:[#allocation10 + $0x60] sm:$0xff] %v594
    %640 = vst [vmem:[#allocation10 + $0x68] sm:$0xff] %v596
    %641 = vst [vmem:[#allocation10 + $0x70] sm:$0xff] %v599
    %642 = vst [vmem:[#allocation10 + $0x78] sm:$0xff] %v601
    %643 = vst [vmem:[#allocation10 + $0x80] sm:$0xff] %v604
    %644 = vst [vmem:[#allocation10 + $0x88] sm:$0xff] %v606
    %645 = vst [vmem:[#allocation10 + $0x90] sm:$0xff] %v609
    %646 = vst [vmem:[#allocation10 + $0x98] sm:$0xff] %v611
    %647 = vst [vmem:[#allocation10 + $0xa0] sm:$0xff] %v614
    %648 = vst [vmem:[#allocation10 + $0xa8] sm:$0xff] %v616
    %649 = vst [vmem:[#allocation10 + $0xb0] sm:$0xff] %v619
    %650 = vst [vmem:[#allocation10 + $0xb8] sm:$0xff] %v621
    %651 = vst [vmem:[#allocation10 + $0xc0] sm:$0xff] %v624
    // Predicated region
    $region46: #{tpu_custom_call.1} parent=1 // pred_check
      _
    $region47: #{tpu_custom_call.1} parent=1 // pred_check_branch
      %653 = sbr.rel (0) target = $region49
    $region48: #{tpu_custom_call.1} parent=1 // pred_region
      %655 = vsyncadd [#allocation4], 0
      %s656 = sshll.u32 [#allocation10], 4
      %s657 = int_to_ptr.vmem [resolvable:$true] %s656
      %s658 = sshll.u32 %s7, 4
      %s659 = int_to_ptr.hbm [resolvable:$true] %s658
      %664 = dma.vmem_to_hbm [thread:$0]  %s657, 3200, %s659, [#allocation4], 128, 128, 8
    $region49: #{tpu_custom_call.1} parent=1 // pred_fallthru
      _
    // Predicated region
    $region50: #{tpu_custom_call.1} parent=1 // pred_check
      _
    $region51: #{tpu_custom_call.1} parent=1 // pred_check_branch
      %666 = sbr.rel (0) target = $region53
    $region52: #{tpu_custom_call.1} parent=1 // pred_region
      %668 = dma.done [#allocation4], 3200
    $region53: #{tpu_custom_call.1} parent=1 // pred_fallthru
      _
    %669 = vsyncpa [#allocation3], 1
    %670 = vsyncpa [#allocation6], 1
    %671 = vsyncpa [#allocation9], 1
    %672 = vsyncpa [#allocation4], 1

</llo_original>
